<compile_context>
chip_gen: v5e
topology: v5e:2x2
jax: 0.10.0
libtpu: 0.0.40
codegen_flags: <defaults>
</compile_context>

<pallas_src>
import functools

import jax
import jax.numpy as jnp
from jax.experimental import pallas as pl
from jax.experimental.pallas import tpu as pltpu

_EPS = 1e-6  # F.pairwise_distance default eps


def _contrastive_loss_kernel(o1_ref, o2_ref, label_ref, out_ref, acc_ref, *,
                             margin, n_rows, tile_rows, steps_per_core,
                             full_tiles, needs_mask, label_resident):
    c = pl.program_id(0)            # partial-sum axis ("parallel", megacore)
    i = pl.program_id(1)            # per-partial batch-tile sweep ("arbitrary")
    t = c * steps_per_core + i      # global batch-tile index

    @pl.when(i == 0)
    def _init():
        acc_ref[...] = jnp.zeros_like(acc_ref)

    # Upcast in-kernel (VPU has slack); HBM traffic stays in the caller dtype.
    o1 = o1_ref[...].astype(jnp.float32)               # (tile_rows, D)
    o2 = o2_ref[...].astype(jnp.float32)               # (tile_rows, D)
    if label_resident:
        # Whole (padded) label lives in VMEM; slice this tile's rows.
        start = t * tile_rows
        if tile_rows % 8 == 0:
            start = pl.multiple_of(start, 8)
        label = label_ref[pl.ds(start, tile_rows), :].astype(jnp.float32)
    else:
        label = label_ref[...].astype(jnp.float32)     # (tile_rows, 1)

    diff = o1 - o2 + _EPS                               # torch pairwise_distance eps
    sq_dist = jnp.sum(diff * diff, axis=-1, keepdims=True)   # (tile_rows, 1)
    dist = jnp.sqrt(sq_dist)                            # euclidean_distance

    # Positive term straight from the squared distance (no sqrt/square
    # round-trip); sqrt only feeds the margin term.
    per_row = (1.0 - label) * sq_dist \
        + label * jnp.square(jnp.maximum(margin - dist, 0.0))   # (tile_rows, 1)

    if not needs_mask:
        # Trace-time knowledge: every scheduled tile is completely in range.
        acc_ref[...] += jnp.sum(per_row, keepdims=True)
    else:
        @pl.when(t < full_tiles)
        def _full_tile():                               # unmasked fast path
            acc_ref[...] += jnp.sum(per_row, keepdims=True)

        @pl.when(t >= full_tiles)
        def _ragged_tile():                             # partial / over-scheduled
            row = t * tile_rows + jax.lax.broadcasted_iota(
                jnp.int32, per_row.shape, 0)
            # jnp.where (not multiply) so garbage/NaN padding cannot poison it.
            acc_ref[...] += jnp.sum(
                jnp.where(row < n_rows, per_row, 0.0), keepdims=True)

    @pl.when(i == pl.num_programs(1) - 1)
    def _finalize():
        out_ref[...] = acc_ref[...].reshape(1, 1, 1)    # this partial's sum


def _scoped_vmem_limit_bytes():
    """64 MiB scoped limit on 128-MiB-VMEM chips (v5e/v6e); 32 MiB otherwise
    (v7x only has 64 MiB physical) or when the query is unavailable."""
    try:
        cap = int(getattr(pltpu.get_tpu_info(), "vmem_capacity_bytes", 0) or 0)
    except Exception:
        cap = 0
    if cap >= 100 * 1024 * 1024:
        return 64 * 1024 * 1024
    return 32 * 1024 * 1024


def _pick_tile_rows(n_rows, d, itemsize, budget_bytes):
    """Largest row-tile (multiple of 8, capped at 1024) such that the
    double-buffered o1 + o2 tiles fit in `budget_bytes` of VMEM."""
    d_padded = max(128, -(-d // 128) * 128)        # lane padding actually stored
    per_row_bytes = 2 * 2 * d_padded * itemsize    # 2 inputs x 2 pipeline buffers
    tn = budget_bytes // max(per_row_bytes, 1)
    tn = int(min(tn, 1024))
    tn = max((tn // 8) * 8, 8)
    if tn >= n_rows:
        return n_rows                              # single full-batch tile
    return tn


def contrastive_loss(output1, output2, label, margin=2.0, *, tile_rows=None):
    """Pallas TPU implementation of ConstrastiveLoss.forward."""
    n, d = output1.shape
    assert output2.shape == (n, d)
    label2d = label.reshape(n, 1)                  # no dtype cast; cast in-kernel

    vmem_limit = _scoped_vmem_limit_bytes()
    if tile_rows is None:
        tn = _pick_tile_rows(n, d, jnp.dtype(output1.dtype).itemsize,
                             budget_bytes=int(0.7 * vmem_limit))
    else:
        tn = min(int(tile_rows), n)

    num_tiles = pl.cdiv(n, tn)
    # Leading "parallel" axis -> independent partial sums so v7x's two
    # TensorCores can each take half the batch sweep (combined in the wrapper);
    # harmless serial loop on single-core chips.
    num_partials = min(2, num_tiles)
    steps_per_core = pl.cdiv(num_tiles, num_partials)
    scheduled_tiles = num_partials * steps_per_core

    full_tiles = n // tn                           # tiles with no ragged rows
    needs_mask = scheduled_tiles > full_tiles      # trace-time decision

    if scheduled_tiles == num_tiles:
        io_map = lambda c, i: (c * steps_per_core + i, 0)
    else:
        # Over-scheduled tiles (odd tile count split over 2 partials) clamp to
        # the last real block; their rows are masked out in-kernel.
        last = num_tiles - 1
        io_map = lambda c, i: (jnp.minimum(c * steps_per_core + i, last), 0)

    # Label: keep it fully resident in VMEM for moderate N (no skinny per-step
    # DMA, no 128-lane-padded double buffer); stream per tile for huge batches.
    scheduled_rows = scheduled_tiles * tn
    label_resident = scheduled_rows * 512 <= (2 << 20)   # <=2 MiB lane-padded
    if label_resident:
        label_arg = (jnp.pad(label2d, ((0, scheduled_rows - n), (0, 0)))
                     if scheduled_rows > n else label2d)
        label_spec = pl.BlockSpec((scheduled_rows, 1), lambda c, i: (0, 0))
    else:
        label_arg = label2d
        label_spec = pl.BlockSpec((tn, 1), io_map)

    kernel = functools.partial(
        _contrastive_loss_kernel,
        margin=float(margin), n_rows=n, tile_rows=tn,
        steps_per_core=steps_per_core, full_tiles=full_tiles,
        needs_mask=needs_mask, label_resident=label_resident)

    partials = pl.pallas_call(
        kernel,
        out_shape=jax.ShapeDtypeStruct((num_partials, 1, 1), jnp.float32),
        grid_spec=pltpu.PrefetchScalarGridSpec(
            num_scalar_prefetch=0,
            grid=(num_partials, steps_per_core),
            in_specs=[
                pl.BlockSpec((tn, d), io_map),
                pl.BlockSpec((tn, d), io_map),
                label_spec,
            ],
            out_specs=pl.BlockSpec((1, 1, 1), lambda c, i: (c, 0, 0)),
            scratch_shapes=[pltpu.VMEM((1, 1), jnp.float32)],
        ),
        compiler_params=pltpu.CompilerParams(
            dimension_semantics=("parallel", "arbitrary"),
            vmem_limit_bytes=vmem_limit,
        ),
    )(output1, output2, label_arg)

    return jnp.sum(partials) / n                    # mean over the true N


def _reference_loss(output1, output2, label, margin=2.0):
    diff = output1 - output2 + _EPS
    dist = jnp.sqrt(jnp.sum(diff * diff, axis=-1, keepdims=True))
    return jnp.mean((1.0 - label) * dist ** 2
                    + label * jnp.maximum(margin - dist, 0.0) ** 2)


if __name__ == "__main__":
    key = jax.random.PRNGKey(0)
    k1, k2, k3 = jax.random.split(key, 3)

    # Shapes implied by the module: a small batch of embedding pairs + labels.
    N, D = 8, 32
    output1 = jax.random.normal(k1, (N, D), dtype=jnp.float32)
    output2 = jax.random.normal(k2, (N, D), dtype=jnp.float32)
    label = jax.random.bernoulli(k3, 0.5, (N, 1)).astype(jnp.float32)

    loss = jax.block_until_ready(
        contrastive_loss(output1, output2, label, margin=2.0))
    ref = _reference_loss(output1, output2, label, margin=2.0)
    assert jnp.allclose(loss, ref, rtol=1e-5, atol=1e-5), (loss, ref)

    # Second check exercises the multi-tile path: dual partial sums, clamped
    # index map, resident padded label, and ragged-last-tile masking.
    N2, D2 = 40, 32
    o1b = jax.random.normal(k1, (N2, D2), dtype=jnp.float32)
    o2b = jax.random.normal(k2, (N2, D2), dtype=jnp.float32)
    lblb = jax.random.bernoulli(k3, 0.5, (N2, 1)).astype(jnp.float32)
    loss2 = jax.block_until_ready(
        contrastive_loss(o1b, o2b, lblb, margin=2.0, tile_rows=16))
    ref2 = _reference_loss(o1b, o2b, lblb, margin=2.0)
    assert jnp.allclose(loss2, ref2, rtol=1e-5, atol=1e-5), (loss2, ref2)

    print("KERNEL_OK")
</pallas_src>

<mosaic_0001>
module attributes {stable_mosaic.version = 11 : i64} {
  func.func @_contrastive_loss_kernel(%arg0: i32, %arg1: i32, %arg2: memref<8x32xf32, #tpu.memory_space<vmem>>, %arg3: memref<8x32xf32, #tpu.memory_space<vmem>>, %arg4: memref<8x1xf32, #tpu.memory_space<vmem>>, %arg5: memref<1x1x1xf32, #tpu.memory_space<vmem>>, %arg6: memref<1x1xf32, #tpu.memory_space<vmem>>) attributes {dimension_semantics = [#tpu.dimension_semantics<parallel>, #tpu.dimension_semantics<arbitrary>], iteration_bounds = array<i64: 1, 1>, scalar_prefetch = 0 : i64, scratch_operands = 1 : i64, tpu.core_type = #tpu.core_type<tc>, window_params = [{transform_indices = @transform_0, window_bounds = array<i64: 8, 32>}, {transform_indices = @transform_1, window_bounds = array<i64: 8, 32>}, {pipeline_mode = #tpu.pipeline_mode<synchronous>, transform_indices = @transform_2, window_bounds = array<i64: 8, 1>}, {transform_indices = @transform_3, window_bounds = array<i64: 1, 1, 1>}]} {
    %c1_i32 = arith.constant 1 : i32
    %0 = arith.muli %arg0, %c1_i32 : i32
    %1 = arith.addi %0, %arg1 : i32
    %c0_i32 = arith.constant 0 : i32
    %2 = arith.cmpi eq, %arg1, %c0_i32 : i32
    %3 = arith.extui %2 : i1 to i32
    %c0_i32_0 = arith.constant 0 : i32
    %4 = arith.cmpi ne, %3, %c0_i32_0 : i32
    scf.if %4 {
      %cst_16 = arith.constant 0.000000e+00 : f32
      %39 = vector.broadcast %cst_16 : f32 to vector<1x1xf32>
      %c0_17 = arith.constant 0 : index
      %c0_18 = arith.constant 0 : index
      %40 = vector.load %arg6[%c0_17, %c0_18] : memref<1x1xf32, #tpu.memory_space<vmem>>, vector<1x1xf32>
      tpu.vector_store %arg6[%c0_17, %c0_18], %39 {strides = array<i32>} : memref<1x1xf32, #tpu.memory_space<vmem>>, vector<1x1xf32>,
    } else {
    }
    %c0 = arith.constant 0 : index
    %c0_1 = arith.constant 0 : index
    %5 = vector.load %arg2[%c0, %c0_1] : memref<8x32xf32, #tpu.memory_space<vmem>>, vector<8x32xf32>
    %c0_2 = arith.constant 0 : index
    %c0_3 = arith.constant 0 : index
    %6 = vector.load %arg3[%c0_2, %c0_3] : memref<8x32xf32, #tpu.memory_space<vmem>>, vector<8x32xf32>
    %c8_i32 = arith.constant 8 : i32
    %7 = arith.muli %1, %c8_i32 : i32
    %8 = tpu.assume_multiple %7, 8 : i32
    %9 = arith.index_cast %8 : i32 to index
    %c0_4 = arith.constant 0 : index
    %10 = vector.load %arg4[%9, %c0_4] : memref<8x1xf32, #tpu.memory_space<vmem>>, vector<8x1xf32>
    %11 = arith.subf %5, %6 : vector<8x32xf32>
    %cst = arith.constant 9.99999997E-7 : f32
    %12 = vector.broadcast %cst : f32 to vector<8x32xf32>
    %13 = arith.addf %11, %12 : vector<8x32xf32>
    %14 = arith.mulf %13, %13 : vector<8x32xf32>
    %cst_5 = arith.constant dense<0.000000e+00> : vector<8xf32>
    %15 = vector.multi_reduction <add>, %14, %cst_5 [1] : vector<8x32xf32> to vector<8xf32>
    %16 = vector.shape_cast %15 : vector<8xf32> to vector<8x1xf32>
    %17 = math.sqrt %16 : vector<8x1xf32>
    %cst_6 = arith.constant 1.000000e+00 : f32
    %18 = vector.broadcast %cst_6 : f32 to vector<8x1xf32>
    %19 = arith.subf %18, %10 : vector<8x1xf32>
    %20 = arith.mulf %19, %16 : vector<8x1xf32>
    %cst_7 = arith.constant 2.000000e+00 : f32
    %21 = vector.broadcast %cst_7 : f32 to vector<8x1xf32>
    %22 = arith.subf %21, %17 : vector<8x1xf32>
    %cst_8 = arith.constant 0.000000e+00 : f32
    %23 = vector.broadcast %cst_8 : f32 to vector<8x1xf32>
    %24 = arith.maximumf %22, %23 : vector<8x1xf32>
    %25 = arith.mulf %24, %24 : vector<8x1xf32>
    %26 = arith.mulf %10, %25 : vector<8x1xf32>
    %27 = arith.addf %20, %26 : vector<8x1xf32>
    %c0_9 = arith.constant 0 : index
    %c0_10 = arith.constant 0 : index
    %28 = vector.load %arg6[%c0_9, %c0_10] : memref<1x1xf32, #tpu.memory_space<vmem>>, vector<1x1xf32>
    %29 = vector.shape_cast %27 : vector<8x1xf32> to vector<1x8x1xf32>
    %cst_11 = arith.constant dense<0.000000e+00> : vector<1xf32>
    %30 = vector.multi_reduction <add>, %29, %cst_11 [1, 2] : vector<1x8x1xf32> to vector<1xf32>
    %31 = vector.shape_cast %30 : vector<1xf32> to vector<1x1x1xf32>
    %32 = vector.extract %31[0, 0, 0] : f32 from vector<1x1x1xf32>
    %33 = vector.broadcast %32 : f32 to vector<1x1xf32>
    %34 = arith.addf %28, %33 : vector<1x1xf32>
    %c0_12 = arith.constant 0 : index
    %c0_13 = arith.constant 0 : index
    %35 = vector.load %arg6[%c0_12, %c0_13] : memref<1x1xf32, #tpu.memory_space<vmem>>, vector<1x1xf32>
    tpu.vector_store %arg6[%c0_12, %c0_13], %34 {strides = array<i32>} : memref<1x1xf32, #tpu.memory_space<vmem>>, vector<1x1xf32>,
    %c0_i32_14 = arith.constant 0 : i32
    %36 = arith.cmpi eq, %arg1, %c0_i32_14 : i32
    %37 = arith.extui %36 : i1 to i32
    %c0_i32_15 = arith.constant 0 : i32
    %38 = arith.cmpi ne, %37, %c0_i32_15 : i32
    scf.if %38 {
      %c0_16 = arith.constant 0 : index
      %c0_17 = arith.constant 0 : index
      %39 = vector.load %arg6[%c0_16, %c0_17] : memref<1x1xf32, #tpu.memory_space<vmem>>, vector<1x1xf32>
      %40 = vector.shape_cast %39 : vector<1x1xf32> to vector<1x1x1xf32>
      %c0_18 = arith.constant 0 : index
      %c0_19 = arith.constant 0 : index
      %c0_20 = arith.constant 0 : index
      %41 = vector.load %arg5[%c0_18, %c0_19, %c0_20] : memref<1x1x1xf32, #tpu.memory_space<vmem>>, vector<1x1x1xf32>
      tpu.vector_store %arg5[%c0_18, %c0_19, %c0_20], %40 {strides = array<i32>} : memref<1x1x1xf32, #tpu.memory_space<vmem>>, vector<1x1x1xf32>,
    } else {
    }
    return
  }
  func.func @transform_0(%arg0: i32, %arg1: i32) -> (i32, i32) {
    %c1_i32 = arith.constant 1 : i32
    %0 = arith.muli %arg0, %c1_i32 : i32
    %1 = arith.addi %0, %arg1 : i32
    %c0_i32 = arith.constant 0 : i32
    %c0_i32_0 = arith.constant 0 : i32
    return %1, %c0_i32 : i32, i32
  }
  func.func @transform_1(%arg0: i32, %arg1: i32) -> (i32, i32) {
    %c1_i32 = arith.constant 1 : i32
    %0 = arith.muli %arg0, %c1_i32 : i32
    %1 = arith.addi %0, %arg1 : i32
    %c0_i32 = arith.constant 0 : i32
    %c0_i32_0 = arith.constant 0 : i32
    return %1, %c0_i32 : i32, i32
  }
  func.func @transform_2(%arg0: i32, %arg1: i32) -> (i32, i32) {
    %c0_i32 = arith.constant 0 : i32
    %c0_i32_0 = arith.constant 0 : i32
    %c0_i32_1 = arith.constant 0 : i32
    return %c0_i32, %c0_i32_0 : i32, i32
  }
  func.func @transform_3(%arg0: i32, %arg1: i32) -> (i32, i32, i32) {
    %c0_i32 = arith.constant 0 : i32
    %c0_i32_0 = arith.constant 0 : i32
    %c0_i32_1 = arith.constant 0 : i32
    return %arg0, %c0_i32, %c0_i32_0 : i32, i32, i32
  }
}

</mosaic_0001>

<llo_original>
// kernel: tpu_custom_call.1
$region0: #{tpu_custom_call.1}
  #allocation0 [shape = 'u32[]', space=smem, size = 0x4, offset = 0x4, fixed_abs, tag = 'smem constant byte address 0x4 - core index']
  #allocation1 [shape = 'u32[72,128]{1,0:T(1,128)}', space=vmem, size = 0x9000, scoped, tag = 'internal scratch']
  #allocation2 [shape = 'f32[1,1]{1,0:T(1,128)}', space=vmem, size = 0x200, scoped, tag = 'scratch operand']
  %s0 = inlined_call_operand.vmem [shape: f32[8,32], index: 0, kind: input, shape index: {}]
  %s1 = inlined_call_operand.hbm [shape: f32[8,32], index: 1, kind: input, shape index: {}]
  %s2 = inlined_call_operand.vmem [shape: f32[8,1], index: 2, kind: input, shape index: {}]
  %s3 = inlined_call_operand.hbm [shape: f32[1,1,1], index: 3, kind: output, shape index: {}]
  %s4 = sld [smem:[#allocation0]]
  $region34: #{tpu_custom_call.1} parent=0
    _
  %s6 = ssub.s32 1, %s4
  %s7 = scalar_select 0, %s6, %s4
  $region1: #{tpu_custom_call.1} parent=0
    #allocation3 [shape = 'u8[4096]{0}', space=vmem, size = 0x1000, scoped, tag = 'input window, operand 1, single buffered']
    #allocation4 [shape = 's32[1]{0}', space=sflag, size = 0x4, scoped, tag = 'scoped memory for tpu_custom_call.1']
    #allocation5 [shape = 's32[1]{0}', space=sflag, size = 0x4, scoped, tag = 'scoped memory for tpu_custom_call.1']
    #allocation6 [shape = 'u8[512]{0}', space=vmem, size = 0x400, scoped, tag = 'output window, operand 0, single buffered']
    %8 = vsyncpa [#allocation4], 0
    %9 = vsyncpa [#allocation5], 0
    // Predicated region
    $region2: #{tpu_custom_call.1} parent=1 // pred_check
      _
    $region3: #{tpu_custom_call.1} parent=1 // pred_check_branch
      %11 = sbr.rel (0) target = $region5
    $region4: #{tpu_custom_call.1} parent=1 // pred_region
      %s12 = sadd.s32 0, 0
      %p13 = scmp.lt.s32.totalorder %s12, 0
      %s14 = scalar_select %p13, %s12, 0
      %s15 = smul.addr %s14, 8
      %s16 = scalar_lea.vmem %s0, %s15
      %s17 = sadd.s32 0, 0
    $region5: #{tpu_custom_call.1} parent=1 // pred_fallthru
      _
    // Predicated region
    $region6: #{tpu_custom_call.1} parent=1 // pred_check
      _
    $region7: #{tpu_custom_call.1} parent=1 // pred_check_branch
      %19 = sbr.rel (0) target = $region9
    $region8: #{tpu_custom_call.1} parent=1 // pred_region
      %s20 = sadd.s32 0, 0
      %22 = vsyncadd [#allocation4], 0
      %s23 = smul.addr %s20, 8
      %s24 = scalar_lea.hbm %s1, %s23
      %s26 = sshll.u32 %s24, 4
      %s27 = int_to_ptr.hbm [resolvable:$true] %s26
      %s28 = sshll.u32 [#allocation3], 4
      %s29 = int_to_ptr.vmem [resolvable:$true] %s28
      %31 = dma.hbm_to_vmem [thread:$0]  %s27, 128, %s29, [#allocation4]
    $region9: #{tpu_custom_call.1} parent=1 // pred_fallthru
      _
    // Predicated region
    $region10: #{tpu_custom_call.1} parent=1 // pred_check
      _
    $region11: #{tpu_custom_call.1} parent=1 // pred_check_branch
      %33 = sbr.rel (0) target = $region13
    $region12: #{tpu_custom_call.1} parent=1 // pred_region
      _
    $region13: #{tpu_custom_call.1} parent=1 // pred_fallthru
      _
    // Predicated region
    $region14: #{tpu_custom_call.1} parent=1 // pred_check
      _
    $region15: #{tpu_custom_call.1} parent=1 // pred_check_branch
      %35 = sbr.rel (0) target = $region17
    $region16: #{tpu_custom_call.1} parent=1 // pred_region
      %37 = dma.done [#allocation4], 128
    $region17: #{tpu_custom_call.1} parent=1 // pred_fallthru
      _
    %s38 = sadd.s32 0, 0
    %p39 = scmp.lt.s32.totalorder %s38, 0
    %s40 = scalar_select %p39, %s38, 0
    %s41 = smul.addr %s40, 8
    %s42 = scalar_lea.vmem %s0, %s41
    %s43 = sadd.s32 0, 0
    %p44 = scmp.lt.s32.totalorder %s43, 0
    %s45 = scalar_select %p44, %s43, 0
    %s46 = smul.addr %s45, 8
    %s47 = scalar_lea.vmem %s0, %s46
    %s48 = sadd.s32 0, 0
    %s49 = sadd.s32 0, 0
    %s50 = sadd.s32 0, 0
    %p51 = scmp.eq.s32.totalorder 0, 0
    // Predicated region
    $region18: #{tpu_custom_call.1} parent=1 // pred_check
      %p52 = pneg %p51
    $region19: #{tpu_custom_call.1} parent=1 // pred_check_branch
      %54 = sbr.rel (%p52) target = $region21
    $region20: #{tpu_custom_call.1} parent=1 // pred_region
      %vm55 = vcmask 0
      %56 = vst.msk [vmem:[#allocation2] sm:$0x1] %vm55, 0.0
    $region21: #{tpu_custom_call.1} parent=1 // pred_fallthru
      _
    %v57 = vld [vmem:[%s47] sm:$0xff]
    %v58 = vld [vmem:[#allocation3] sm:$0xff]
    %s59 = smul.u32 %s50, 8
    %s60 = scalar_lea.vmem %s2, %s59
    %v61 = vld [vmem:[%s60] sm:$0xff]
    %v62 = vsub.f32 %v57, %v58
    %v63 = vadd.f32 %v62, 1e-06
    %v64 = vmul.f32 %v63, %v63
    %vm65 = vcmask 261120
    %v66 = vsel %vm65, %v64, 0.0
    %67 = vadd.xlane.f32.xlu0 %v66
    %v68 = vpop.xlane.xlu0 %67
    %v69 = vrsqrt.pop %v68
    %v70 = vmul.f32 %v69, %v68
    %v71 = vmul.f32 %v70, %v69
    %v72 = vmul.f32 0.5, %v71
    %v73 = vsub.f32 1.5, %v72
    %v74 = vmul.f32 %v69, %v73
    %v75 = vmul.f32 %v68, %v74
    %vm76 = vcmp.eq.f32.partialorder %v68, inf
    %v77 = vsel %vm76, %v68, %v75
    %vm78 = vcmp.eq.f32.partialorder %v68, 0.0
    %v79 = vand.u32 %v68, 2147483648
    %v80 = vsel %vm78, %v79, %v77
    %v81 = vsub.f32 1.0, %v61
    %v82 = vmul.f32 %v81, %v68
    %v83 = vsub.f32 2.0, %v80
    %v84 = vmax.f32 %v83, 0.0
    %v85 = vmul.f32 %v84, %v84
    %v86 = vmul.f32 %v61, %v85
    %v87 = vadd.f32 %v82, %v86
    %v88 = vld [vmem:[#allocation2] sm:$0x1]
    %vm89 = vcmask 7168
    %v90 = vsel %vm89, %v87, 0.0
    %91 = vadd.xlane.f32.xlu0 %v90
    %v92 = vpop.xlane.xlu0 %91
    %v93 = vrot.slane %v92, 4
    %v94 = vadd.f32 %v92, %v93
    %v95 = vrot.slane %v94, 2
    %v96 = vadd.f32 %v94, %v95
    %v97 = vrot.slane %v96, 1
    %v98 = vadd.f32 %v96, %v97
    %s99 = vtos %v98
    %v100 = vstv %s99
    %v101 = vadd.f32 %v88, %v100
    %vm102 = vcmask 0
    %103 = vst.msk [vmem:[#allocation2] sm:$0x1] %vm102, %v101
    // Predicated region
    $region22: #{tpu_custom_call.1} parent=1 // pred_check
      %p104 = pneg %p51
    $region23: #{tpu_custom_call.1} parent=1 // pred_check_branch
      %106 = sbr.rel (%p104) target = $region25
    $region24: #{tpu_custom_call.1} parent=1 // pred_region
      %v107 = vld [vmem:[#allocation2] sm:$0x1]
      %108 = vst.msk [vmem:[#allocation6] sm:$0x1] %vm102, %v107
    $region25: #{tpu_custom_call.1} parent=1 // pred_fallthru
      _
    // Predicated region
    $region26: #{tpu_custom_call.1} parent=1 // pred_check
      _
    $region27: #{tpu_custom_call.1} parent=1 // pred_check_branch
      %110 = sbr.rel (0) target = $region29
    $region28: #{tpu_custom_call.1} parent=1 // pred_region
      %112 = vsyncadd [#allocation5], 0
      %s114 = sshll.u32 [#allocation6], 4
      %s115 = int_to_ptr.vmem [resolvable:$true] %s114
      %s116 = sshll.u32 %s3, 4
      %s117 = int_to_ptr.hbm [resolvable:$true] %s116
      %119 = dma.vmem_to_hbm [thread:$0]  %s115, 16, %s117, [#allocation5]
    $region29: #{tpu_custom_call.1} parent=1 // pred_fallthru
      _
    // Predicated region
    $region30: #{tpu_custom_call.1} parent=1 // pred_check
      _
    $region31: #{tpu_custom_call.1} parent=1 // pred_check_branch
      %121 = sbr.rel (0) target = $region33
    $region32: #{tpu_custom_call.1} parent=1 // pred_region
      %123 = dma.done [#allocation5], 16
    $region33: #{tpu_custom_call.1} parent=1 // pred_fallthru
      _
    %124 = vsyncpa [#allocation4], 1
    %125 = vsyncpa [#allocation5], 1

</llo_original>
